<compile_context>
chip_gen: v7x
topology: tpu7x:2x2x1
jax: 0.10.0
libtpu: 0.0.40
codegen_flags: <defaults>
</compile_context>

<pallas_src>
import functools

import jax
import jax.numpy as jnp
import numpy as np
from jax.experimental import pallas as pl
from jax.experimental.pallas import tpu as pltpu


def _conv3x3_kernel(x_ref, w_ref, o_ref, acc_ref, *, tr, wp):
    """One grid step: one image x one CB-wide Cout tile x one TR-row tile.

    x_ref:   (1, (H+2)*Wp, 3*Cin) bf16  kw-packed, zero-padded, flattened activations
             (resident: constant block index across the two inner grid axes)
    w_ref:   (3, 3*Cin, CB)       bf16  weights; kh-indexed, kw folded into K
    o_ref:   (1, TR, CB)                flattened output tile
    acc_ref: (TR, CB)             f32   VMEM accumulator scratch
    """
    r = pl.program_id(2)
    # Three aligned-view matmuls on the MXU (K = 3*Cin), accumulated in f32 scratch.
    for kh in range(3):
        start = pl.multiple_of(r * tr + kh * wp, 8)
        part = jnp.dot(x_ref[0, pl.ds(start, tr), :], w_ref[kh],
                       preferred_element_type=jnp.float32)
        if kh == 0:
            acc_ref[...] = part
        else:
            acc_ref[...] += part
    o_ref[0] = acc_ref[...].astype(o_ref.dtype)


def _pick_cout_block(cout):
    """256 on v6e/v7x (256-wide MXU), 128 on v5e; fall back gracefully."""
    prefer = 256
    try:
        if "v5" in jax.devices()[0].device_kind.lower():
            prefer = 128
    except Exception:  # pragma: no cover - device query is best-effort
        pass
    for cb in (prefer, 256, 128):
        if cout % cb == 0:
            return cb
    return cout


def _pick_row_tile(n_rows, target=512):
    """Largest divisor of n_rows that is a multiple of 8 and <= target."""
    best = n_rows
    hi = min(target, n_rows)
    for tr in range(8, hi + 1, 8):
        if n_rows % tr == 0:
            best = tr
    return best


def conv2d_3x3_same(x_nchw, w_oihw, *, cout_block=None, row_tile=None):
    """Equivalent of torch.nn.Conv2d(Cin, Cout, 3, stride=1, padding=1, bias=False)."""
    N, Cin, H, W = x_nchw.shape
    Cout = w_oihw.shape[0]
    assert w_oihw.shape == (Cout, Cin, 3, 3)

    CB = cout_block if cout_block is not None else _pick_cout_block(Cout)
    assert Cout % CB == 0

    Wp = ((W + 7) // 8) * 8          # output width padded up to a sublane multiple
    K = 3 * Cin                      # kw-packed contraction width
    n_rows = H * Wp                  # flattened output rows per image

    TR = row_tile if row_tile is not None else _pick_row_tile(n_rows)
    assert n_rows % TR == 0 and TR % 8 == 0

    # ---- layout prep (plain XLA; fuses into one pass over the activations) ----
    # TODO(synk): keep the whole model NHWC to drop this transpose pair entirely.
    x_nhwc = jnp.transpose(x_nchw, (0, 2, 3, 1))                    # (N, H, W, Cin)
    x_wpad = jnp.pad(x_nhwc, ((0, 0), (0, 0), (1, 1), (0, 0)))      # (N, H, W+2, Cin)
    # pack the 3 kw taps into the channel axis (kw-major): (N, H, W, 3*Cin)
    x_pk = jnp.concatenate([x_wpad[:, :, kw:kw + W, :] for kw in range(3)], axis=-1)
    # kh halo rows on H, sublane alignment padding on W, then cast + flatten.
    x_pk = jnp.pad(x_pk, ((0, 0), (1, 1), (0, Wp - W), (0, 0)))     # (N, H+2, Wp, 3Cin)
    x_pk = x_pk.astype(jnp.bfloat16).reshape(N, (H + 2) * Wp, K)

    # weights: OIHW -> (kh, kw, ci, co) -> (kh, kw*Cin+ci, co), bf16.
    w_pk = jnp.transpose(w_oihw, (2, 3, 1, 0)).reshape(3, K, Cout).astype(jnp.bfloat16)

    out_dtype = x_nchw.dtype
    kernel = functools.partial(_conv3x3_kernel, tr=TR, wp=Wp)

    cost = pl.CostEstimate(
        flops=2 * N * H * W * 9 * Cin * Cout,
        transcendentals=0,
        bytes_accessed=x_pk.size * 2 + w_pk.size * 2
        + N * n_rows * Cout * jnp.dtype(out_dtype).itemsize,
    )

    # Size VMEM to what the tiles actually need (+headroom) instead of a blanket 32 MiB.
    x_blk = (H + 2) * Wp * K * 2
    w_blk = 3 * K * CB * 2
    o_blk = TR * CB * jnp.dtype(out_dtype).itemsize
    acc_blk = TR * CB * 4
    vmem_need = 2 * (x_blk + w_blk + o_blk) + acc_blk
    vmem_limit = min(int(vmem_need * 1.5) + (4 << 20), 64 * 1024 * 1024)

    out_flat = pl.pallas_call(
        kernel,
        out_shape=jax.ShapeDtypeStruct((N, n_rows, Cout), out_dtype),
        grid_spec=pltpu.PrefetchScalarGridSpec(
            num_scalar_prefetch=0,
            # rows innermost: weights re-DMA only when the Cout tile changes,
            # activations only when the image changes.
            grid=(N, Cout // CB, n_rows // TR),
            in_specs=[
                # activations: resident across both inner axes
                pl.BlockSpec((1, (H + 2) * Wp, K), lambda n, c, r: (n, 0, 0)),
                # weights: small per-Cout-tile block, independent of the row axis
                pl.BlockSpec((3, K, CB), lambda n, c, r: (0, 0, c)),
            ],
            out_specs=pl.BlockSpec((1, TR, CB), lambda n, c, r: (n, r, c)),
            scratch_shapes=[pltpu.VMEM((TR, CB), jnp.float32)],
        ),
        compiler_params=pltpu.CompilerParams(
            dimension_semantics=("parallel", "parallel", "parallel"),
            vmem_limit_bytes=vmem_limit,
        ),
        cost_estimate=cost,
    )(x_pk, w_pk)

    # un-flatten, drop alignment columns, back to NCHW (fuses with the transpose).
    out_nhwc = out_flat.reshape(N, H, Wp, Cout)[:, :, :W, :]
    return jnp.transpose(out_nhwc, (0, 3, 1, 2))


if __name__ == "__main__":
    # Channels fixed by the module (64 -> 256); batch/spatial shrunk from [1, 64, 56, 56].
    N, Cin, H, W, Cout = 2, 64, 16, 16, 256

    key = jax.random.PRNGKey(0)
    kx, kw = jax.random.split(key)
    x = jax.random.normal(kx, (N, Cin, H, W), dtype=jnp.float32)
    w = jax.random.normal(kw, (Cout, Cin, 3, 3), dtype=jnp.float32) * 0.05

    # row_tile=64 exercises the row-tiled grid (4 row tiles per image) at test size.
    y = conv2d_3x3_same(x, w, row_tile=64)
    jax.block_until_ready(y)

    # Reference check against XLA's conv (f32); bf16 compute stays within tolerance.
    y_ref = jax.lax.conv_general_dilated(
        x, w, window_strides=(1, 1), padding=((1, 1), (1, 1)),
        dimension_numbers=("NCHW", "OIHW", "NCHW"),
        preferred_element_type=jnp.float32)
    assert y.shape == (N, Cout, H, W)
    np.testing.assert_allclose(np.asarray(y), np.asarray(y_ref), rtol=2e-2, atol=2e-2)

    print("KERNEL_OK")
</pallas_src>

<mosaic_0001>
module attributes {stable_mosaic.version = 11 : i64} {
  func.func @_conv3x3_kernel(%arg0: i32, %arg1: i32, %arg2: i32, %arg3: memref<1x288x192xbf16, #tpu.memory_space<vmem>>, %arg4: memref<3x192x256xbf16, #tpu.memory_space<vmem>>, %arg5: memref<1x64x256xf32, #tpu.memory_space<vmem>>, %arg6: memref<64x256xf32, #tpu.memory_space<vmem>>) attributes {dimension_semantics = [#tpu.dimension_semantics<parallel>, #tpu.dimension_semantics<parallel>, #tpu.dimension_semantics<parallel>], iteration_bounds = array<i64: 2, 1, 4>, scalar_prefetch = 0 : i64, scratch_operands = 1 : i64, tpu.core_type = #tpu.core_type<tc>, window_params = [{transform_indices = @transform_0, window_bounds = array<i64: 1, 288, 192>}, {transform_indices = @transform_1, window_bounds = array<i64: 3, 192, 256>}, {transform_indices = @transform_2, window_bounds = array<i64: 1, 64, 256>}]} {
    %c64_i32 = arith.constant 64 : i32
    %0 = arith.muli %arg2, %c64_i32 : i32
    %c0_i32 = arith.constant 0 : i32
    %1 = arith.addi %0, %c0_i32 : i32
    %2 = tpu.assume_multiple %1, 8 : i32
    %c0 = arith.constant 0 : index
    %3 = arith.index_cast %2 : i32 to index
    %c0_0 = arith.constant 0 : index
    %4 = vector.load %arg3[%c0, %3, %c0_0] : memref<1x288x192xbf16, #tpu.memory_space<vmem>>, vector<1x64x192xbf16>
    %5 = vector.shape_cast %4 : vector<1x64x192xbf16> to vector<64x192xbf16>
    %c0_1 = arith.constant 0 : index
    %c0_2 = arith.constant 0 : index
    %c0_3 = arith.constant 0 : index
    %6 = vector.load %arg4[%c0_1, %c0_2, %c0_3] : memref<3x192x256xbf16, #tpu.memory_space<vmem>>, vector<1x192x256xbf16>
    %7 = vector.shape_cast %6 : vector<1x192x256xbf16> to vector<192x256xbf16>
    %cst = arith.constant dense<0.000000e+00> : vector<64x256xf32>
    %8 = tpu.matmul %5, %7, %cst {dimension_numbers = #tpu.dot_dimension_numbers<[1], [0], [0], [1], [0, 0, 1, 1], [], []>} : vector<64x192xbf16>, vector<192x256xbf16>, vector<64x256xf32> -> vector<64x256xf32>
    %c0_4 = arith.constant 0 : index
    %c0_5 = arith.constant 0 : index
    %9 = vector.load %arg6[%c0_4, %c0_5] : memref<64x256xf32, #tpu.memory_space<vmem>>, vector<64x256xf32>
    tpu.vector_store %arg6[%c0_4, %c0_5], %8 {strides = array<i32>} : memref<64x256xf32, #tpu.memory_space<vmem>>, vector<64x256xf32>,
    %c64_i32_6 = arith.constant 64 : i32
    %10 = arith.muli %arg2, %c64_i32_6 : i32
    %c16_i32 = arith.constant 16 : i32
    %11 = arith.addi %10, %c16_i32 : i32
    %12 = tpu.assume_multiple %11, 8 : i32
    %c0_7 = arith.constant 0 : index
    %13 = arith.index_cast %12 : i32 to index
    %c0_8 = arith.constant 0 : index
    %14 = vector.load %arg3[%c0_7, %13, %c0_8] : memref<1x288x192xbf16, #tpu.memory_space<vmem>>, vector<1x64x192xbf16>
    %15 = vector.shape_cast %14 : vector<1x64x192xbf16> to vector<64x192xbf16>
    %c1 = arith.constant 1 : index
    %c0_9 = arith.constant 0 : index
    %c0_10 = arith.constant 0 : index
    %16 = vector.load %arg4[%c1, %c0_9, %c0_10] : memref<3x192x256xbf16, #tpu.memory_space<vmem>>, vector<1x192x256xbf16>
    %17 = vector.shape_cast %16 : vector<1x192x256xbf16> to vector<192x256xbf16>
    %cst_11 = arith.constant dense<0.000000e+00> : vector<64x256xf32>
    %18 = tpu.matmul %15, %17, %cst_11 {dimension_numbers = #tpu.dot_dimension_numbers<[1], [0], [0], [1], [0, 0, 1, 1], [], []>} : vector<64x192xbf16>, vector<192x256xbf16>, vector<64x256xf32> -> vector<64x256xf32>
    %c0_12 = arith.constant 0 : index
    %c0_13 = arith.constant 0 : index
    %19 = vector.load %arg6[%c0_12, %c0_13] : memref<64x256xf32, #tpu.memory_space<vmem>>, vector<64x256xf32>
    %20 = arith.addf %19, %18 : vector<64x256xf32>
    %c0_14 = arith.constant 0 : index
    %c0_15 = arith.constant 0 : index
    %21 = vector.load %arg6[%c0_14, %c0_15] : memref<64x256xf32, #tpu.memory_space<vmem>>, vector<64x256xf32>
    tpu.vector_store %arg6[%c0_14, %c0_15], %20 {strides = array<i32>} : memref<64x256xf32, #tpu.memory_space<vmem>>, vector<64x256xf32>,
    %c64_i32_16 = arith.constant 64 : i32
    %22 = arith.muli %arg2, %c64_i32_16 : i32
    %c32_i32 = arith.constant 32 : i32
    %23 = arith.addi %22, %c32_i32 : i32
    %24 = tpu.assume_multiple %23, 8 : i32
    %c0_17 = arith.constant 0 : index
    %25 = arith.index_cast %24 : i32 to index
    %c0_18 = arith.constant 0 : index
    %26 = vector.load %arg3[%c0_17, %25, %c0_18] : memref<1x288x192xbf16, #tpu.memory_space<vmem>>, vector<1x64x192xbf16>
    %27 = vector.shape_cast %26 : vector<1x64x192xbf16> to vector<64x192xbf16>
    %c2 = arith.constant 2 : index
    %c0_19 = arith.constant 0 : index
    %c0_20 = arith.constant 0 : index
    %28 = vector.load %arg4[%c2, %c0_19, %c0_20] : memref<3x192x256xbf16, #tpu.memory_space<vmem>>, vector<1x192x256xbf16>
    %29 = vector.shape_cast %28 : vector<1x192x256xbf16> to vector<192x256xbf16>
    %cst_21 = arith.constant dense<0.000000e+00> : vector<64x256xf32>
    %30 = tpu.matmul %27, %29, %cst_21 {dimension_numbers = #tpu.dot_dimension_numbers<[1], [0], [0], [1], [0, 0, 1, 1], [], []>} : vector<64x192xbf16>, vector<192x256xbf16>, vector<64x256xf32> -> vector<64x256xf32>
    %c0_22 = arith.constant 0 : index
    %c0_23 = arith.constant 0 : index
    %31 = vector.load %arg6[%c0_22, %c0_23] : memref<64x256xf32, #tpu.memory_space<vmem>>, vector<64x256xf32>
    %32 = arith.addf %31, %30 : vector<64x256xf32>
    %c0_24 = arith.constant 0 : index
    %c0_25 = arith.constant 0 : index
    %33 = vector.load %arg6[%c0_24, %c0_25] : memref<64x256xf32, #tpu.memory_space<vmem>>, vector<64x256xf32>
    tpu.vector_store %arg6[%c0_24, %c0_25], %32 {strides = array<i32>} : memref<64x256xf32, #tpu.memory_space<vmem>>, vector<64x256xf32>,
    %c0_26 = arith.constant 0 : index
    %c0_27 = arith.constant 0 : index
    %34 = vector.load %arg6[%c0_26, %c0_27] : memref<64x256xf32, #tpu.memory_space<vmem>>, vector<64x256xf32>
    %c0_28 = arith.constant 0 : index
    %c0_29 = arith.constant 0 : index
    %c0_30 = arith.constant 0 : index
    %35 = vector.load %arg5[%c0_28, %c0_29, %c0_30] : memref<1x64x256xf32, #tpu.memory_space<vmem>>, vector<1x64x256xf32>
    %36 = vector.shape_cast %35 : vector<1x64x256xf32> to vector<64x256xf32>
    %37 = vector.shape_cast %34 : vector<64x256xf32> to vector<1x64x256xf32>
    tpu.vector_store %arg5[%c0_28, %c0_29, %c0_30], %37 {strides = array<i32>} : memref<1x64x256xf32, #tpu.memory_space<vmem>>, vector<1x64x256xf32>,
    return
  }
  func.func @transform_0(%arg0: i32, %arg1: i32, %arg2: i32) -> (i32, i32, i32) {
    %c0_i32 = arith.constant 0 : i32
    %c0_i32_0 = arith.constant 0 : i32
    %c0_i32_1 = arith.constant 0 : i32
    return %arg0, %c0_i32, %c0_i32_0 : i32, i32, i32
  }
  func.func @transform_1(%arg0: i32, %arg1: i32, %arg2: i32) -> (i32, i32, i32) {
    %c0_i32 = arith.constant 0 : i32
    %c0_i32_0 = arith.constant 0 : i32
    %c0_i32_1 = arith.constant 0 : i32
    return %c0_i32, %c0_i32_0, %arg1 : i32, i32, i32
  }
  func.func @transform_2(%arg0: i32, %arg1: i32, %arg2: i32) -> (i32, i32, i32) {
    %c0_i32 = arith.constant 0 : i32
    return %arg0, %arg2, %arg1 : i32, i32, i32
  }
}

</mosaic_0001>

<llo_original>
// kernel: tpu_custom_call.1
$region0: #{tpu_custom_call.1}
  #allocation0 [shape = 'u32[]', space=smem, size = 0x4, offset = 0x4, fixed_abs, tag = 'smem constant byte address 0x4 - core index']
  #allocation1 [shape = 'u32[144,128]{1,0:T(1,128)}', space=vmem, size = 0x12000, scoped, tag = 'internal scratch']
  #allocation2 [shape = 'f32[64,256]{1,0:T(8,128)}', space=vmem, size = 0x10000, scoped, tag = 'scratch operand']
  %s0 = inlined_call_operand.hbm [shape: bf16[2,288,192], index: 0, kind: input, shape index: {}]
  %s1 = inlined_call_operand.hbm [shape: bf16[3,192,256], index: 1, kind: input, shape index: {}]
  %s2 = inlined_call_operand.hbm [shape: f32[2,256,256], index: 2, kind: output, shape index: {}]
  %s3 = sld [smem:[#allocation0]]
  $region49: #{tpu_custom_call.1} parent=0
    _
  %s5 = ssub.s32 1, %s3
  %s6 = scalar_select 0, %s5, %s3
  $region1: #{tpu_custom_call.1} parent=0
    #allocation3 [shape = 'u8[294912]{0}', space=vmem, size = 0x48000, scoped, tag = 'input window, operand 0']
    #allocation4 [shape = 's32[2]{0}', space=sflag, size = 0x8, scoped, tag = 'scoped memory for tpu_custom_call.1']
    #allocation5 [shape = 's32[2]{0}', space=sflag, size = 0x8, scoped, tag = 'scoped memory for tpu_custom_call.1']
    #allocation6 [shape = 'u8[294912]{0}', space=vmem, size = 0x48000, scoped, tag = 'input window, operand 1, single buffered']
    #allocation7 [shape = 's32[1]{0}', space=sflag, size = 0x4, scoped, tag = 'scoped memory for tpu_custom_call.1']
    #allocation8 [shape = 'u8[131072]{0}', space=vmem, size = 0x20000, scoped, tag = 'output window, operand 0']
    %7 = vsyncpa [#allocation4], 0
    %s8 = scalar_lea.sflag [#allocation4], 1
    %9 = vsyncpa %s8, 0
    %10 = vsyncpa [#allocation7], 0
    %11 = vsyncpa [#allocation5], 0
    %s12 = scalar_lea.sflag [#allocation5], 1
    %13 = vsyncpa %s12, 0
    loop: start=0, step=1, limit=10
    $region2: #{tpu_custom_call.1} parent=1 // loop_pre_header
      _
    $region3: #{tpu_custom_call.1} parent=1 // loop_header
      %s15 = sphi 0, %s19
      %p16 = scmp.ge.s32.totalorder %s15, 10
      %s22 = sphi 0, %s41
      %s23 = sphi 0, %s37
      %s24 = sphi 0, %s33
      %s25 = sphi 0, %s22
      %s26 = sphi 0, %s23
      %s27 = sphi 0, %s24
      %s28 = sphi 0, %s25
      %s29 = sphi 0, %s26
      %s30 = sphi 0, %s27
      %s44 = sphi 0, %s46
      %s47 = sphi 0, %s44
      %s48 = sphi 0, %s47
      %s64 = sphi 0, %s48
      %s70 = sphi 0, %s72
      %s73 = sphi 0, %s70
      %s74 = sphi 0, %s73
      %s90 = sphi 0, %s74
      %s100 = sphi 0, %s102
      %s103 = sphi 0, %s100
      %s104 = sphi 0, %s103
      %s120 = sphi 0, %s104
    $region4: #{tpu_custom_call.1} parent=1 // loop_header_branch
      %18 = sbr.rel (%p16) target = $region8
    $region5: #{tpu_custom_call.1} parent=1 // loop_body
      %s20 = ssub.s32 %s15, 1
      %s21 = ssub.s32 %s15, 2
      %s31 = sadd.s32 1, %s24
      %p32 = scmp.ge.s32.totalorder %s31, 4
      %s33 = scalar_select %p32, 0, %s31
      %s34 = sadd.s32 1, %s23
      %s35 = scalar_select %p32, %s34, %s23
      %p36 = scmp.ge.s32.totalorder %s35, 1
      %s37 = scalar_select %p36, 0, %s35
      %s38 = sadd.s32 1, %s22
      %s39 = scalar_select %p36, %s38, %s22
      %p40 = scmp.ge.s32.totalorder %s39, 2
      %s41 = scalar_select %p40, 0, %s39
      %s42 = ssub.s32 %s22, %s41
      %p43 = scmp.eq.s32.totalorder %s42, 0
      %s45 = sadd.s32 %s44, 1
      %s46 = scalar_select %p43, %s44, %s45
      %p49 = pneg %p43
      %p50 = scmp.eq.s32.totalorder %s15, 7
      %p51 = por %p49, %p50
      %p52 = scmp.ne.s32.totalorder %s44, %s47
      %p53 = scmp.eq.s32.totalorder %s15, 0
      %p54 = por %p52, %p53
      %p55 = scmp.ne.s32.totalorder %s44, %s47
      %p56 = scmp.eq.s32.totalorder %s20, 7
      %p57 = por %p55, %p56
      %p58 = scmp.ne.s32.totalorder %s47, %s48
      %p59 = scmp.eq.s32.totalorder %s20, 0
      %p60 = por %p58, %p59
      %p61 = scmp.ne.s32.totalorder %s47, %s48
      %p62 = scmp.eq.s32.totalorder %s21, 7
      %p63 = por %p61, %p62
      %p65 = scmp.ne.s32.totalorder %s48, %s64
      %p66 = scmp.eq.s32.totalorder %s21, 0
      %p67 = por %p65, %p66
      %s68 = ssub.s32 %s23, %s37
      %p69 = scmp.eq.s32.totalorder %s68, 0
      %s71 = sadd.s32 %s70, 1
      %s72 = scalar_select %p69, %s70, %s71
      %p75 = pneg %p69
      %p76 = scmp.eq.s32.totalorder %s15, 7
      %p77 = por %p75, %p76
      %p78 = scmp.ne.s32.totalorder %s70, %s73
      %p79 = scmp.eq.s32.totalorder %s15, 0
      %p80 = por %p78, %p79
      %p81 = scmp.ne.s32.totalorder %s70, %s73
      %p82 = scmp.eq.s32.totalorder %s20, 7
      %p83 = por %p81, %p82
      %p84 = scmp.ne.s32.totalorder %s73, %s74
      %p85 = scmp.eq.s32.totalorder %s20, 0
      %p86 = por %p84, %p85
      %p87 = scmp.ne.s32.totalorder %s73, %s74
      %p88 = scmp.eq.s32.totalorder %s21, 7
      %p89 = por %p87, %p88
      %p91 = scmp.ne.s32.totalorder %s74, %s90
      %p92 = scmp.eq.s32.totalorder %s21, 0
      %p93 = por %p91, %p92
      %s94 = ssub.s32 %s22, %s41
      %s95 = ssub.s32 %s24, %s33
      %s96 = sor.u32 %s94, %s95
      %s97 = ssub.s32 %s23, %s37
      %s98 = sor.u32 %s96, %s97
      %p99 = scmp.eq.s32.totalorder %s98, 0
      %s101 = sadd.s32 %s100, 1
      %s102 = scalar_select %p99, %s100, %s101
      %p105 = pneg %p99
      %p106 = scmp.eq.s32.totalorder %s15, 7
      %p107 = por %p105, %p106
      %p108 = scmp.ne.s32.totalorder %s100, %s103
      %p109 = scmp.eq.s32.totalorder %s15, 0
      %p110 = por %p108, %p109
      %p111 = scmp.ne.s32.totalorder %s100, %s103
      %p112 = scmp.eq.s32.totalorder %s20, 7
      %p113 = por %p111, %p112
      %p114 = scmp.ne.s32.totalorder %s103, %s104
      %p115 = scmp.eq.s32.totalorder %s20, 0
      %p116 = por %p114, %p115
      %p117 = scmp.ne.s32.totalorder %s103, %s104
      %p118 = scmp.eq.s32.totalorder %s21, 7
      %p119 = por %p117, %p118
      %p121 = scmp.ne.s32.totalorder %s104, %s120
      %p122 = scmp.eq.s32.totalorder %s21, 0
      %p123 = por %p121, %p122
      %p124 = scmp.le.s32.totalorder 1, %s15
      %p125 = scmp.lt.s32.totalorder %s15, 9
      %p126 = pnand %p124, %p125
      %p127 = pneg %p126
      // Predicated region
      $region9: #{tpu_custom_call.1} parent=5 // pred_check
        _
      $region10: #{tpu_custom_call.1} parent=5 // pred_check_branch
        %129 = sbr.rel (%p126) target = $region12
      $region11: #{tpu_custom_call.1} parent=5 // pred_region
        %s130 = ssub.s32 %s15, 1
        // Predicated region
        $region13: #{tpu_custom_call.1} parent=11 // pred_check
          %p131 = pneg %p86
        $region14: #{tpu_custom_call.1} parent=11 // pred_check_branch
          %133 = sbr.rel (%p131) target = $region16
        $region15: #{tpu_custom_call.1} parent=11 // pred_region
          %s134 = smul.u32 2, %s26
          %s136 = ssub.s32 9216, 9216
          %137 = vsyncadd [#allocation7], %s136
          %s138 = smul.addr %s134, 64
          %s139 = scalar_lea.hbm %s1, %s138
          %s140 = sshll.u32 [#allocation6], 4
          %s141 = int_to_ptr.vmem [resolvable:$true] %s140
          %146 = dma.hbm_to_vmem [thread:$0]  %s139, 9216, %s141, [#allocation7], 128, 128, 8
        $region16: #{tpu_custom_call.1} parent=11 // pred_fallthru
          _
      $region12: #{tpu_custom_call.1} parent=5 // pred_fallthru
        _
      %p147 = scmp.lt.s32.totalorder %s15, 8
      // Predicated region
      $region17: #{tpu_custom_call.1} parent=5 // pred_check
        %p148 = pneg %p147
      $region18: #{tpu_custom_call.1} parent=5 // pred_check_branch
        %150 = sbr.rel (%p148) target = $region20
      $region19: #{tpu_custom_call.1} parent=5 // pred_region
        // Predicated region
        $region21: #{tpu_custom_call.1} parent=19 // pred_check
          %p151 = pneg %p54
        $region22: #{tpu_custom_call.1} parent=19 // pred_check_branch
          %153 = sbr.rel (%p151) target = $region24
        $region23: #{tpu_custom_call.1} parent=19 // pred_region
          %s154 = sand.u32 %s44, 1
          %s155 = scalar_lea.sflag [#allocation4], %s154
          %s156 = sand.u32 %s44, 1
          %s157 = smul.addr %s156, 288
          %s158 = scalar_lea.vmem [#allocation3], %s157
          %s160 = ssub.s32 4608, 4608
          %161 = vsyncadd %s155, %s160
          %s162 = smul.addr %s22, 72
          %s163 = smul.addr %s162, 64
          %s164 = scalar_lea.hbm %s0, %s163
          %s165 = sshll.u32 %s158, 4
          %s166 = int_to_ptr.vmem [resolvable:$true] %s165
          %171 = dma.hbm_to_vmem [thread:$0]  %s164, 4608, %s166, %s155, 128, 128, 8
        $region24: #{tpu_custom_call.1} parent=19 // pred_fallthru
          _
      $region20: #{tpu_custom_call.1} parent=5 // pred_fallthru
        _
      %p172 = scmp.le.s32.totalorder 1, %s15
      %p173 = scmp.lt.s32.totalorder %s15, 9
      %p174 = pnand %p172, %p173
      %p175 = pneg %p174
      // Predicated region
      $region25: #{tpu_custom_call.1} parent=5 // pred_check
        _
      $region26: #{tpu_custom_call.1} parent=5 // pred_check_branch
        %177 = sbr.rel (%p174) target = $region28
      $region27: #{tpu_custom_call.1} parent=5 // pred_region
        %s178 = ssub.s32 %s15, 1
        %s179 = sand.u32 %s47, 1
        %s180 = scalar_lea.sflag [#allocation4], %s179
        %s181 = sand.u32 %s47, 1
        %s182 = smul.addr %s181, 288
        %s183 = scalar_lea.vmem [#allocation3], %s182
        // Predicated region
        $region29: #{tpu_custom_call.1} parent=27 // pred_check
          %p184 = pneg %p60
        $region30: #{tpu_custom_call.1} parent=27 // pred_check_branch
          %186 = sbr.rel (%p184) target = $region32
        $region31: #{tpu_custom_call.1} parent=27 // pred_region
          %187 = dma.done %s180, 4608
        $region32: #{tpu_custom_call.1} parent=27 // pred_fallthru
          _
        // Predicated region
        $region33: #{tpu_custom_call.1} parent=27 // pred_check
          %p188 = pneg %p86
        $region34: #{tpu_custom_call.1} parent=27 // pred_check_branch
          %190 = sbr.rel (%p188) target = $region36
        $region35: #{tpu_custom_call.1} parent=27 // pred_region
          %191 = dma.done [#allocation7], 9216
        $region36: #{tpu_custom_call.1} parent=27 // pred_fallthru
          _
        %s192 = sand.u32 %s47, 1
        %s193 = scalar_lea.sflag [#allocation4], %s192
        %s194 = sand.u32 %s47, 1
        %s195 = smul.addr %s194, 288
        %s196 = scalar_lea.vmem [#allocation3], %s195
        %p197 = pneg %p60
        %p198 = pneg %p57
        %p199 = pneg %p86
        %p200 = pneg %p83
        %p201 = pneg %p116
        %p202 = pneg %p113
        %s203 = sand.u32 %s103, 1
        %s204 = scalar_lea.sflag [#allocation5], %s203
        %s205 = sand.u32 %s103, 1
        %s206 = smul.addr %s205, 128
        %s207 = scalar_lea.vmem [#allocation8], %s206
        %s208 = smul.u32 2, %s26
        %s209 = smul.u32 8, %s27
        %s210 = smul.u32 2, %s26
        %s212 = smul.u32 %s27, 64
        %s213 = sshra.s32 %s212, 3
        %s214 = sand.u32 %s212, 7
        %s215 = smul.u32 %s213, 2
        %s216 = smul.addr %s215, 4
        %s217 = scalar_lea.vmem %s183, %s216 [#allocation3]
        %v218 = vld [vmem:[%s217] sm:$0xff]
        %v219 = vld [vmem:[%s217 + $0x8] sm:$0xff]
        %v220 = vld [vmem:[%s217 + $0x10] sm:$0xff]
        %v221 = vld [vmem:[%s217 + $0x18] sm:$0xff]
        %v222 = vld [vmem:[%s217 + $0x20] sm:$0xff]
        %v223 = vld [vmem:[%s217 + $0x28] sm:$0xff]
        %v224 = vld [vmem:[%s217 + $0x30] sm:$0xff]
        %v225 = vld [vmem:[%s217 + $0x38] sm:$0xff]
        %v226 = vld [vmem:[#allocation6] sm:$0xff]
        %v227 = vld [vmem:[#allocation6 + $0x8] sm:$0xff]
        %v228 = vld [vmem:[#allocation6 + $0x10] sm:$0xff]
        %v229 = vld [vmem:[#allocation6 + $0x18] sm:$0xff]
        %v230 = vld [vmem:[#allocation6 + $0x20] sm:$0xff]
        %v231 = vld [vmem:[#allocation6 + $0x28] sm:$0xff]
        %v232 = vld [vmem:[#allocation6 + $0x30] sm:$0xff]
        %v233 = vld [vmem:[#allocation6 + $0x38] sm:$0xff]
        %v234 = vld [vmem:[#allocation6 + $0x40] sm:$0xff]
        %v235 = vld [vmem:[#allocation6 + $0x48] sm:$0xff]
        %v236 = vld [vmem:[#allocation6 + $0x50] sm:$0xff]
        %v237 = vld [vmem:[#allocation6 + $0x58] sm:$0xff]
        %v238 = vld [vmem:[#allocation6 + $0x60] sm:$0xff]
        %v239 = vld [vmem:[#allocation6 + $0x68] sm:$0xff]
        %v240 = vld [vmem:[#allocation6 + $0x70] sm:$0xff]
        %v241 = vld [vmem:[#allocation6 + $0x78] sm:$0xff]
        %v242 = vld [vmem:[#allocation6 + $0x80] sm:$0xff]
        %v243 = vld [vmem:[#allocation6 + $0x88] sm:$0xff]
        %v244 = vld [vmem:[#allocation6 + $0x90] sm:$0xff]
        %v245 = vld [vmem:[#allocation6 + $0x98] sm:$0xff]
        %v246 = vld [vmem:[#allocation6 + $0xa0] sm:$0xff]
        %v247 = vld [vmem:[#allocation6 + $0xa8] sm:$0xff]
        %v248 = vld [vmem:[#allocation6 + $0xb0] sm:$0xff]
        %v249 = vld [vmem:[#allocation6 + $0xb8] sm:$0xff]
        %v258 = vunpack.c.l.b16 %v218
        %v259 = vunpack.c.h.b16 %v218
        %v260 = vunpack.c.l.b16 %v219
        %v261 = vunpack.c.h.b16 %v219
        %v262 = vunpack.c.l.b16 %v220
        %v263 = vunpack.c.h.b16 %v220
        %v264 = vunpack.c.l.b16 %v221
        %v265 = vunpack.c.h.b16 %v221
        %v266 = vunpack.c.l.b16 %v222
        %v267 = vunpack.c.h.b16 %v222
        %v268 = vunpack.c.l.b16 %v223
        %v269 = vunpack.c.h.b16 %v223
        %v270 = vunpack.c.l.b16 %v224
        %v271 = vunpack.c.h.b16 %v224
        %v272 = vunpack.c.l.b16 %v225
        %v273 = vunpack.c.h.b16 %v225
        %v274 = vpack.c.b16 %v260, %v258
        %v275 = vpack.c.b16 %v261, %v259
        %v276 = vpack.c.b16 %v264, %v262
        %v277 = vpack.c.b16 %v265, %v263
        %v278 = vpack.c.b16 %v268, %v266
        %v279 = vpack.c.b16 %v269, %v267
        %v280 = vpack.c.b16 %v272, %v270
        %v281 = vpack.c.b16 %v273, %v271
        %v310 = vunpack.c.l.b16 %v226
        %v311 = vunpack.c.h.b16 %v226
        %v312 = vunpack.c.l.b16 %v227
        %v313 = vunpack.c.h.b16 %v227
        %v314 = vunpack.c.l.b16 %v228
        %v315 = vunpack.c.h.b16 %v228
        %v316 = vunpack.c.l.b16 %v229
        %v317 = vunpack.c.h.b16 %v229
        %v318 = vunpack.c.l.b16 %v230
        %v319 = vunpack.c.h.b16 %v230
        %v320 = vunpack.c.l.b16 %v231
        %v321 = vunpack.c.h.b16 %v231
        %v322 = vunpack.c.l.b16 %v232
        %v323 = vunpack.c.h.b16 %v232
        %v324 = vunpack.c.l.b16 %v233
        %v325 = vunpack.c.h.b16 %v233
        %v326 = vunpack.c.l.b16 %v234
        %v327 = vunpack.c.h.b16 %v234
        %v328 = vunpack.c.l.b16 %v235
        %v329 = vunpack.c.h.b16 %v235
        %v330 = vunpack.c.l.b16 %v236
        %v331 = vunpack.c.h.b16 %v236
        %v332 = vunpack.c.l.b16 %v237
        %v333 = vunpack.c.h.b16 %v237
        %v334 = vunpack.c.l.b16 %v238
        %v335 = vunpack.c.h.b16 %v238
        %v336 = vunpack.c.l.b16 %v239
        %v337 = vunpack.c.h.b16 %v239
        %v338 = vunpack.c.l.b16 %v240
        %v339 = vunpack.c.h.b16 %v240
        %v340 = vunpack.c.l.b16 %v241
        %v341 = vunpack.c.h.b16 %v241
        %v342 = vunpack.c.l.b16 %v242
        %v343 = vunpack.c.h.b16 %v242
        %v344 = vunpack.c.l.b16 %v243
        %v345 = vunpack.c.h.b16 %v243
        %v346 = vunpack.c.l.b16 %v244
        %v347 = vunpack.c.h.b16 %v244
        %v348 = vunpack.c.l.b16 %v245
        %v349 = vunpack.c.h.b16 %v245
        %v350 = vunpack.c.l.b16 %v246
        %v351 = vunpack.c.h.b16 %v246
        %v352 = vunpack.c.l.b16 %v247
        %v353 = vunpack.c.h.b16 %v247
        %v354 = vunpack.c.l.b16 %v248
        %v355 = vunpack.c.h.b16 %v248
        %v356 = vunpack.c.l.b16 %v249
        %v357 = vunpack.c.h.b16 %v249
        %v358 = vpack.c.b16 %v312, %v310
        %v359 = vpack.c.b16 %v313, %v311
        %v360 = vpack.c.b16 %v316, %v314
        %v361 = vpack.c.b16 %v317, %v315
        %v362 = vpack.c.b16 %v320, %v318
        %v363 = vpack.c.b16 %v321, %v319
        %v364 = vpack.c.b16 %v324, %v322
        %v365 = vpack.c.b16 %v325, %v323
        %v366 = vpack.c.b16 %v328, %v326
        %v367 = vpack.c.b16 %v329, %v327
        %v368 = vpack.c.b16 %v332, %v330
        %v369 = vpack.c.b16 %v333, %v331
        %v370 = vpack.c.b16 %v336, %v334
        %v371 = vpack.c.b16 %v337, %v335
        %v372 = vpack.c.b16 %v340, %v338
        %v373 = vpack.c.b16 %v341, %v339
        %v374 = vpack.c.b16 %v344, %v342
        %v375 = vpack.c.b16 %v345, %v343
        %v376 = vpack.c.b16 %v348, %v346
        %v377 = vpack.c.b16 %v349, %v347
        %v378 = vpack.c.b16 %v352, %v350
        %v379 = vpack.c.b16 %v353, %v351
        %v380 = vpack.c.b16 %v356, %v354
        %v381 = vpack.c.b16 %v357, %v355
        %vm406 = vcmask 523264
        %v408 = vsel %vm406, %v275, 0
        %v411 = vsel %vm406, %v277, 0
        %v414 = vsel %vm406, %v279, 0
        %v417 = vsel %vm406, %v281, 0
        %419 = vmatprep.subr.bf16.mxu0 %v359
        %420 = vmatpush1.bf16.msra.mxu0 %v358
        %421 = vmatprep.subr.bf16.mxu0 %v361
        %422 = vmatpush1.bf16.msra.mxu0 %v360
        %423 = vmatprep.subr.bf16.mxu0 %v363
        %424 = vmatpush1.bf16.msra.mxu0 %v362
        %425 = vmatprep.subr.bf16.mxu0 %v365
        %426 = vmatpush1.bf16.msra.mxu0 %v364
        %427 = vmatprep.subr.bf16.mxu0 %v367
        %428 = vmatpush1.bf16.msra.mxu0 %v366
        %429 = vmatprep.subr.bf16.mxu0 %v369
        %430 = vmatpush1.bf16.msra.mxu0 %v368
        %431 = vmatprep.subr.bf16.mxu0 %v371
        %432 = vmatpush1.bf16.msra.mxu0 %v370
        %433 = vmatprep.subr.bf16.mxu0 %v373
        %434 = vmatpush1.bf16.msra.mxu0 %v372
        %435 = vmatprep.subr.bf16.mxu0 %v375
        %436 = vmatpush1.bf16.msra.mxu0 %v374
        %437 = vmatprep.subr.bf16.mxu0 %v377
        %438 = vmatpush1.bf16.msra.mxu0 %v376
        %439 = vmatprep.subr.bf16.mxu0 %v379
        %440 = vmatpush1.bf16.msra.mxu0 %v378
        %441 = vmatprep.subr.bf16.mxu0 %v381
        %442 = vmatpush1.bf16.msra.mxu0 %v380
        %443 = vmatprep.subr.bf16.mxu0 0
        %444 = vmatpush1.bf16.msra.mxu0 0
        %445 = vmatprep.subr.bf16.mxu0 0
        %446 = vmatpush1.bf16.msra.mxu0 0
        %447 = vmatprep.subr.bf16.mxu0 0
        %448 = vmatpush1.bf16.msra.mxu0 0
        %449 = vmatprep.subr.bf16.mxu0 0
        %450 = vmatpush1.bf16.msra.mxu0 0
        %451 = vmatprep.mubr.bf16.mxu0 %v408
        %452 = vmatmul.mubr.bf16.gmra.mrb[0].mxu0 %v274
        %v453 = vpop.f32.mrb[0].mxu0
        %v454 = vadd.f32 0.0, %v453
        %v455 = vpop.f32.mrb[0].mxu0
        %v456 = vadd.f32 0.0, %v455
        %v457 = vpop.f32.mrb[0].mxu0
        %v458 = vadd.f32 0.0, %v457
        %v459 = vpop.f32.mrb[0].mxu0
        %v460 = vadd.f32 0.0, %v459
        %461 = vmatprep.mubr.bf16.mxu0 %v411
        %462 = vmatmul.mubr.bf16.gmra.mrb[0].mxu0 %v276
        %v463 = vpop.f32.mrb[0].mxu0
        %v464 = vadd.f32 0.0, %v463
        %v465 = vpop.f32.mrb[0].mxu0
        %v466 = vadd.f32 0.0, %v465
        %v467 = vpop.f32.mrb[0].mxu0
        %v468 = vadd.f32 0.0, %v467
        %v469 = vpop.f32.mrb[0].mxu0
        %v470 = vadd.f32 0.0, %v469
        %471 = vmatprep.mubr.bf16.mxu0 %v414
        %472 = vmatmul.mubr.bf16.gmra.mrb[0].mxu0 %v278
        %v473 = vpop.f32.mrb[0].mxu0
        %v474 = vadd.f32 0.0, %v473
        %v475 = vpop.f32.mrb[0].mxu0
        %v476 = vadd.f32 0.0, %v475
        %v477 = vpop.f32.mrb[0].mxu0
        %v478 = vadd.f32 0.0, %v477
        %v479 = vpop.f32.mrb[0].mxu0
        %v480 = vadd.f32 0.0, %v479
        %481 = vmatprep.mubr.bf16.mxu0 %v417
        %482 = vmatmul.mubr.bf16.gmra.mrb[0].mxu0 %v280
        %v483 = vpop.f32.mrb[0].mxu0
        %v484 = vadd.f32 0.0, %v483
        %v485 = vpop.f32.mrb[0].mxu0
        %v486 = vadd.f32 0.0, %v485
        %v487 = vpop.f32.mrb[0].mxu0
        %v488 = vadd.f32 0.0, %v487
        %v489 = vpop.f32.mrb[0].mxu0
        %v490 = vadd.f32 0.0, %v489
        %491 = vdwg.mxu0
        %492 = vst [vmem:[#allocation2] sm:$0xff] %v454
        %493 = vst [vmem:[#allocation2 + $0x8] sm:$0xff] %v456
        %494 = vst [vmem:[#allocation2 + $0x10] sm:$0xff] %v458
        %495 = vst [vmem:[#allocation2 + $0x18] sm:$0xff] %v460
        %496 = vst [vmem:[#allocation2 + $0x20] sm:$0xff] %v464
        %497 = vst [vmem:[#allocation2 + $0x28] sm:$0xff] %v466
        %498 = vst [vmem:[#allocation2 + $0x30] sm:$0xff] %v468
        %499 = vst [vmem:[#allocation2 + $0x38] sm:$0xff] %v470
        %500 = vst [vmem:[#allocation2 + $0x40] sm:$0xff] %v474
        %501 = vst [vmem:[#allocation2 + $0x48] sm:$0xff] %v476
        %502 = vst [vmem:[#allocation2 + $0x50] sm:$0xff] %v478
        %503 = vst [vmem:[#allocation2 + $0x58] sm:$0xff] %v480
        %504 = vst [vmem:[#allocation2 + $0x60] sm:$0xff] %v484
        %505 = vst [vmem:[#allocation2 + $0x68] sm:$0xff] %v486
        %506 = vst [vmem:[#allocation2 + $0x70] sm:$0xff] %v488
        %507 = vst [vmem:[#allocation2 + $0x78] sm:$0xff] %v490
        %s508 = sadd.s32 %s212, 16
        %s509 = sshra.s32 %s508, 3
        %s510 = sand.u32 %s508, 7
        %s511 = smul.u32 %s509, 2
        %s512 = smul.addr %s511, 4
        %s513 = scalar_lea.vmem %s183, %s512 [#allocation3]
        %v514 = vld [vmem:[%s513] sm:$0xff]
        %v515 = vld [vmem:[%s513 + $0x8] sm:$0xff]
        %v516 = vld [vmem:[%s513 + $0x10] sm:$0xff]
        %v517 = vld [vmem:[%s513 + $0x18] sm:$0xff]
        %v518 = vld [vmem:[%s513 + $0x20] sm:$0xff]
        %v519 = vld [vmem:[%s513 + $0x28] sm:$0xff]
        %v520 = vld [vmem:[%s513 + $0x30] sm:$0xff]
        %v521 = vld [vmem:[%s513 + $0x38] sm:$0xff]
        %s522 = scalar_lea.vmem [#allocation6], 192
        %v523 = vld [vmem:[%s522] sm:$0xff]
        %v524 = vld [vmem:[%s522 + $0x8] sm:$0xff]
        %v525 = vld [vmem:[%s522 + $0x10] sm:$0xff]
        %v526 = vld [vmem:[%s522 + $0x18] sm:$0xff]
        %v527 = vld [vmem:[%s522 + $0x20] sm:$0xff]
        %v528 = vld [vmem:[%s522 + $0x28] sm:$0xff]
        %v529 = vld [vmem:[%s522 + $0x30] sm:$0xff]
        %v530 = vld [vmem:[%s522 + $0x38] sm:$0xff]
        %v531 = vld [vmem:[%s522 + $0x40] sm:$0xff]
        %v532 = vld [vmem:[%s522 + $0x48] sm:$0xff]
        %v533 = vld [vmem:[%s522 + $0x50] sm:$0xff]
        %v534 = vld [vmem:[%s522 + $0x58] sm:$0xff]
        %v535 = vld [vmem:[%s522 + $0x60] sm:$0xff]
        %v536 = vld [vmem:[%s522 + $0x68] sm:$0xff]
        %v537 = vld [vmem:[%s522 + $0x70] sm:$0xff]
        %v538 = vld [vmem:[%s522 + $0x78] sm:$0xff]
        %v539 = vld [vmem:[%s522 + $0x80] sm:$0xff]
        %v540 = vld [vmem:[%s522 + $0x88] sm:$0xff]
        %v541 = vld [vmem:[%s522 + $0x90] sm:$0xff]
        %v542 = vld [vmem:[%s522 + $0x98] sm:$0xff]
        %v543 = vld [vmem:[%s522 + $0xa0] sm:$0xff]
        %v544 = vld [vmem:[%s522 + $0xa8] sm:$0xff]
        %v545 = vld [vmem:[%s522 + $0xb0] sm:$0xff]
        %v546 = vld [vmem:[%s522 + $0xb8] sm:$0xff]
        %v555 = vunpack.c.l.b16 %v514
        %v556 = vunpack.c.h.b16 %v514
        %v557 = vunpack.c.l.b16 %v515
        %v558 = vunpack.c.h.b16 %v515
        %v559 = vunpack.c.l.b16 %v516
        %v560 = vunpack.c.h.b16 %v516
        %v561 = vunpack.c.l.b16 %v517
        %v562 = vunpack.c.h.b16 %v517
        %v563 = vunpack.c.l.b16 %v518
        %v564 = vunpack.c.h.b16 %v518
        %v565 = vunpack.c.l.b16 %v519
        %v566 = vunpack.c.h.b16 %v519
        %v567 = vunpack.c.l.b16 %v520
        %v568 = vunpack.c.h.b16 %v520
        %v569 = vunpack.c.l.b16 %v521
        %v570 = vunpack.c.h.b16 %v521
        %v571 = vpack.c.b16 %v557, %v555
        %v572 = vpack.c.b16 %v558, %v556
        %v573 = vpack.c.b16 %v561, %v559
        %v574 = vpack.c.b16 %v562, %v560
        %v575 = vpack.c.b16 %v565, %v563
        %v576 = vpack.c.b16 %v566, %v564
        %v577 = vpack.c.b16 %v569, %v567
        %v578 = vpack.c.b16 %v570, %v568
        %v607 = vunpack.c.l.b16 %v523
        %v608 = vunpack.c.h.b16 %v523
        %v609 = vunpack.c.l.b16 %v524
        %v610 = vunpack.c.h.b16 %v524
        %v611 = vunpack.c.l.b16 %v525
        %v612 = vunpack.c.h.b16 %v525
        %v613 = vunpack.c.l.b16 %v526
        %v614 = vunpack.c.h.b16 %v526
        %v615 = vunpack.c.l.b16 %v527
        %v616 = vunpack.c.h.b16 %v527
        %v617 = vunpack.c.l.b16 %v528
        %v618 = vunpack.c.h.b16 %v528
        %v619 = vunpack.c.l.b16 %v529
        %v620 = vunpack.c.h.b16 %v529
        %v621 = vunpack.c.l.b16 %v530
        %v622 = vunpack.c.h.b16 %v530
        %v623 = vunpack.c.l.b16 %v531
        %v624 = vunpack.c.h.b16 %v531
        %v625 = vunpack.c.l.b16 %v532
        %v626 = vunpack.c.h.b16 %v532
        %v627 = vunpack.c.l.b16 %v533
        %v628 = vunpack.c.h.b16 %v533
        %v629 = vunpack.c.l.b16 %v534
        %v630 = vunpack.c.h.b16 %v534
        %v631 = vunpack.c.l.b16 %v535
        %v632 = vunpack.c.h.b16 %v535
        %v633 = vunpack.c.l.b16 %v536
        %v634 = vunpack.c.h.b16 %v536
        %v635 = vunpack.c.l.b16 %v537
        %v636 = vunpack.c.h.b16 %v537
        %v637 = vunpack.c.l.b16 %v538
        %v638 = vunpack.c.h.b16 %v538
        %v639 = vunpack.c.l.b16 %v539
        %v640 = vunpack.c.h.b16 %v539
        %v641 = vunpack.c.l.b16 %v540
        %v642 = vunpack.c.h.b16 %v540
        %v643 = vunpack.c.l.b16 %v541
        %v644 = vunpack.c.h.b16 %v541
        %v645 = vunpack.c.l.b16 %v542
        %v646 = vunpack.c.h.b16 %v542
        %v647 = vunpack.c.l.b16 %v543
        %v648 = vunpack.c.h.b16 %v543
        %v649 = vunpack.c.l.b16 %v544
        %v650 = vunpack.c.h.b16 %v544
        %v651 = vunpack.c.l.b16 %v545
        %v652 = vunpack.c.h.b16 %v545
        %v653 = vunpack.c.l.b16 %v546
        %v654 = vunpack.c.h.b16 %v546
        %v655 = vpack.c.b16 %v609, %v607
        %v656 = vpack.c.b16 %v610, %v608
        %v657 = vpack.c.b16 %v613, %v611
        %v658 = vpack.c.b16 %v614, %v612
        %v659 = vpack.c.b16 %v617, %v615
        %v660 = vpack.c.b16 %v618, %v616
        %v661 = vpack.c.b16 %v621, %v619
        %v662 = vpack.c.b16 %v622, %v620
        %v663 = vpack.c.b16 %v625, %v623
        %v664 = vpack.c.b16 %v626, %v624
        %v665 = vpack.c.b16 %v629, %v627
        %v666 = vpack.c.b16 %v630, %v628
        %v667 = vpack.c.b16 %v633, %v631
        %v668 = vpack.c.b16 %v634, %v632
        %v669 = vpack.c.b16 %v637, %v635
        %v670 = vpack.c.b16 %v638, %v636
        %v671 = vpack.c.b16 %v641, %v639
        %v672 = vpack.c.b16 %v642, %v640
        %v673 = vpack.c.b16 %v645, %v643
        %v674 = vpack.c.b16 %v646, %v644
        %v675 = vpack.c.b16 %v649, %v647
        %v676 = vpack.c.b16 %v650, %v648
        %v677 = vpack.c.b16 %v653, %v651
        %v678 = vpack.c.b16 %v654, %v652
        %v704 = vsel %vm406, %v572, 0
        %v707 = vsel %vm406, %v574, 0
        %v710 = vsel %vm406, %v576, 0
        %v713 = vsel %vm406, %v578, 0
        %715 = vmatprep.subr.bf16.mxu0 %v656
        %716 = vmatpush1.bf16.msra.mxu0 %v655
        %717 = vmatprep.subr.bf16.mxu0 %v658
        %718 = vmatpush1.bf16.msra.mxu0 %v657
        %719 = vmatprep.subr.bf16.mxu0 %v660
        %720 = vmatpush1.bf16.msra.mxu0 %v659
        %721 = vmatprep.subr.bf16.mxu0 %v662
        %722 = vmatpush1.bf16.msra.mxu0 %v661
        %723 = vmatprep.subr.bf16.mxu0 %v664
        %724 = vmatpush1.bf16.msra.mxu0 %v663
        %725 = vmatprep.subr.bf16.mxu0 %v666
        %726 = vmatpush1.bf16.msra.mxu0 %v665
        %727 = vmatprep.subr.bf16.mxu0 %v668
        %728 = vmatpush1.bf16.msra.mxu0 %v667
        %729 = vmatprep.subr.bf16.mxu0 %v670
        %730 = vmatpush1.bf16.msra.mxu0 %v669
        %731 = vmatprep.subr.bf16.mxu0 %v672
        %732 = vmatpush1.bf16.msra.mxu0 %v671
        %733 = vmatprep.subr.bf16.mxu0 %v674
        %734 = vmatpush1.bf16.msra.mxu0 %v673
        %735 = vmatprep.subr.bf16.mxu0 %v676
        %736 = vmatpush1.bf16.msra.mxu0 %v675
        %737 = vmatprep.subr.bf16.mxu0 %v678
        %738 = vmatpush1.bf16.msra.mxu0 %v677
        %739 = vmatprep.subr.bf16.mxu0 0
        %740 = vmatpush1.bf16.msra.mxu0 0
        %741 = vmatprep.subr.bf16.mxu0 0
        %742 = vmatpush1.bf16.msra.mxu0 0
        %743 = vmatprep.subr.bf16.mxu0 0
        %744 = vmatpush1.bf16.msra.mxu0 0
        %745 = vmatprep.subr.bf16.mxu0 0
        %746 = vmatpush1.bf16.msra.mxu0 0
        %747 = vmatprep.mubr.bf16.mxu0 %v704
        %748 = vmatmul.mubr.bf16.gmra.mrb[0].mxu0 %v571
        %v749 = vpop.f32.mrb[0].mxu0
        %v750 = vadd.f32 0.0, %v749
        %v751 = vpop.f32.mrb[0].mxu0
        %v752 = vadd.f32 0.0, %v751
        %v753 = vpop.f32.mrb[0].mxu0
        %v754 = vadd.f32 0.0, %v753
        %v755 = vpop.f32.mrb[0].mxu0
        %v756 = vadd.f32 0.0, %v755
        %757 = vmatprep.mubr.bf16.mxu0 %v707
        %758 = vmatmul.mubr.bf16.gmra.mrb[0].mxu0 %v573
        %v759 = vpop.f32.mrb[0].mxu0
        %v760 = vadd.f32 0.0, %v759
        %v761 = vpop.f32.mrb[0].mxu0
        %v762 = vadd.f32 0.0, %v761
        %v763 = vpop.f32.mrb[0].mxu0
        %v764 = vadd.f32 0.0, %v763
        %v765 = vpop.f32.mrb[0].mxu0
        %v766 = vadd.f32 0.0, %v765
        %767 = vmatprep.mubr.bf16.mxu0 %v710
        %768 = vmatmul.mubr.bf16.gmra.mrb[0].mxu0 %v575
        %v769 = vpop.f32.mrb[0].mxu0
        %v770 = vadd.f32 0.0, %v769
        %v771 = vpop.f32.mrb[0].mxu0
        %v772 = vadd.f32 0.0, %v771
        %v773 = vpop.f32.mrb[0].mxu0
        %v774 = vadd.f32 0.0, %v773
        %v775 = vpop.f32.mrb[0].mxu0
        %v776 = vadd.f32 0.0, %v775
        %777 = vmatprep.mubr.bf16.mxu0 %v713
        %778 = vmatmul.mubr.bf16.gmra.mrb[0].mxu0 %v577
        %v779 = vpop.f32.mrb[0].mxu0
        %v780 = vadd.f32 0.0, %v779
        %v781 = vpop.f32.mrb[0].mxu0
        %v782 = vadd.f32 0.0, %v781
        %v783 = vpop.f32.mrb[0].mxu0
        %v784 = vadd.f32 0.0, %v783
        %v785 = vpop.f32.mrb[0].mxu0
        %v786 = vadd.f32 0.0, %v785
        %787 = vdwg.mxu0
        %v788 = vld [vmem:[#allocation2] sm:$0xff]
        %v789 = vld [vmem:[#allocation2 + $0x8] sm:$0xff]
        %v790 = vld [vmem:[#allocation2 + $0x10] sm:$0xff]
        %v791 = vld [vmem:[#allocation2 + $0x18] sm:$0xff]
        %v792 = vld [vmem:[#allocation2 + $0x20] sm:$0xff]
        %v793 = vld [vmem:[#allocation2 + $0x28] sm:$0xff]
        %v794 = vld [vmem:[#allocation2 + $0x30] sm:$0xff]
        %v795 = vld [vmem:[#allocation2 + $0x38] sm:$0xff]
        %v796 = vld [vmem:[#allocation2 + $0x40] sm:$0xff]
        %v797 = vld [vmem:[#allocation2 + $0x48] sm:$0xff]
        %v798 = vld [vmem:[#allocation2 + $0x50] sm:$0xff]
        %v799 = vld [vmem:[#allocation2 + $0x58] sm:$0xff]
        %v800 = vld [vmem:[#allocation2 + $0x60] sm:$0xff]
        %v801 = vld [vmem:[#allocation2 + $0x68] sm:$0xff]
        %v802 = vld [vmem:[#allocation2 + $0x70] sm:$0xff]
        %v803 = vld [vmem:[#allocation2 + $0x78] sm:$0xff]
        %v804 = vadd.f32 %v788, %v750
        %v805 = vadd.f32 %v789, %v752
        %v806 = vadd.f32 %v790, %v754
        %v807 = vadd.f32 %v791, %v756
        %v808 = vadd.f32 %v792, %v760
        %v809 = vadd.f32 %v793, %v762
        %v810 = vadd.f32 %v794, %v764
        %v811 = vadd.f32 %v795, %v766
        %v812 = vadd.f32 %v796, %v770
        %v813 = vadd.f32 %v797, %v772
        %v814 = vadd.f32 %v798, %v774
        %v815 = vadd.f32 %v799, %v776
        %v816 = vadd.f32 %v800, %v780
        %v817 = vadd.f32 %v801, %v782
        %v818 = vadd.f32 %v802, %v784
        %v819 = vadd.f32 %v803, %v786
        %820 = vst [vmem:[#allocation2] sm:$0xff] %v804
        %821 = vst [vmem:[#allocation2 + $0x8] sm:$0xff] %v805
        %822 = vst [vmem:[#allocation2 + $0x10] sm:$0xff] %v806
        %823 = vst [vmem:[#allocation2 + $0x18] sm:$0xff] %v807
        %824 = vst [vmem:[#allocation2 + $0x20] sm:$0xff] %v808
        %825 = vst [vmem:[#allocation2 + $0x28] sm:$0xff] %v809
        %826 = vst [vmem:[#allocation2 + $0x30] sm:$0xff] %v810
        %827 = vst [vmem:[#allocation2 + $0x38] sm:$0xff] %v811
        %828 = vst [vmem:[#allocation2 + $0x40] sm:$0xff] %v812
        %829 = vst [vmem:[#allocation2 + $0x48] sm:$0xff] %v813
        %830 = vst [vmem:[#allocation2 + $0x50] sm:$0xff] %v814
        %831 = vst [vmem:[#allocation2 + $0x58] sm:$0xff] %v815
        %832 = vst [vmem:[#allocation2 + $0x60] sm:$0xff] %v816
        %833 = vst [vmem:[#allocation2 + $0x68] sm:$0xff] %v817
        %834 = vst [vmem:[#allocation2 + $0x70] sm:$0xff] %v818
        %835 = vst [vmem:[#allocation2 + $0x78] sm:$0xff] %v819
        %s836 = sadd.s32 %s212, 32
        %s837 = sshra.s32 %s836, 3
        %s838 = sand.u32 %s836, 7
        %s839 = smul.u32 %s837, 2
        %s840 = smul.addr %s839, 4
        %s841 = scalar_lea.vmem %s183, %s840 [#allocation3]
        %v842 = vld [vmem:[%s841] sm:$0xff]
        %v843 = vld [vmem:[%s841 + $0x8] sm:$0xff]
        %v844 = vld [vmem:[%s841 + $0x10] sm:$0xff]
        %v845 = vld [vmem:[%s841 + $0x18] sm:$0xff]
        %v846 = vld [vmem:[%s841 + $0x20] sm:$0xff]
        %v847 = vld [vmem:[%s841 + $0x28] sm:$0xff]
        %v848 = vld [vmem:[%s841 + $0x30] sm:$0xff]
        %v849 = vld [vmem:[%s841 + $0x38] sm:$0xff]
        %s850 = scalar_lea.vmem [#allocation6], 384
        %v851 = vld [vmem:[%s850] sm:$0xff]
        %v852 = vld [vmem:[%s850 + $0x8] sm:$0xff]
        %v853 = vld [vmem:[%s850 + $0x10] sm:$0xff]
        %v854 = vld [vmem:[%s850 + $0x18] sm:$0xff]
        %v855 = vld [vmem:[%s850 + $0x20] sm:$0xff]
        %v856 = vld [vmem:[%s850 + $0x28] sm:$0xff]
        %v857 = vld [vmem:[%s850 + $0x30] sm:$0xff]
        %v858 = vld [vmem:[%s850 + $0x38] sm:$0xff]
        %v859 = vld [vmem:[%s850 + $0x40] sm:$0xff]
        %v860 = vld [vmem:[%s850 + $0x48] sm:$0xff]
        %v861 = vld [vmem:[%s850 + $0x50] sm:$0xff]
        %v862 = vld [vmem:[%s850 + $0x58] sm:$0xff]
        %v863 = vld [vmem:[%s850 + $0x60] sm:$0xff]
        %v864 = vld [vmem:[%s850 + $0x68] sm:$0xff]
        %v865 = vld [vmem:[%s850 + $0x70] sm:$0xff]
        %v866 = vld [vmem:[%s850 + $0x78] sm:$0xff]
        %v867 = vld [vmem:[%s850 + $0x80] sm:$0xff]
        %v868 = vld [vmem:[%s850 + $0x88] sm:$0xff]
        %v869 = vld [vmem:[%s850 + $0x90] sm:$0xff]
        %v870 = vld [vmem:[%s850 + $0x98] sm:$0xff]
        %v871 = vld [vmem:[%s850 + $0xa0] sm:$0xff]
        %v872 = vld [vmem:[%s850 + $0xa8] sm:$0xff]
        %v873 = vld [vmem:[%s850 + $0xb0] sm:$0xff]
        %v874 = vld [vmem:[%s850 + $0xb8] sm:$0xff]
        %v883 = vunpack.c.l.b16 %v842
        %v884 = vunpack.c.h.b16 %v842
        %v885 = vunpack.c.l.b16 %v843
        %v886 = vunpack.c.h.b16 %v843
        %v887 = vunpack.c.l.b16 %v844
        %v888 = vunpack.c.h.b16 %v844
        %v889 = vunpack.c.l.b16 %v845
        %v890 = vunpack.c.h.b16 %v845
        %v891 = vunpack.c.l.b16 %v846
        %v892 = vunpack.c.h.b16 %v846
        %v893 = vunpack.c.l.b16 %v847
        %v894 = vunpack.c.h.b16 %v847
        %v895 = vunpack.c.l.b16 %v848
        %v896 = vunpack.c.h.b16 %v848
        %v897 = vunpack.c.l.b16 %v849
        %v898 = vunpack.c.h.b16 %v849
        %v899 = vpack.c.b16 %v885, %v883
        %v900 = vpack.c.b16 %v886, %v884
        %v901 = vpack.c.b16 %v889, %v887
        %v902 = vpack.c.b16 %v890, %v888
        %v903 = vpack.c.b16 %v893, %v891
        %v904 = vpack.c.b16 %v894, %v892
        %v905 = vpack.c.b16 %v897, %v895
        %v906 = vpack.c.b16 %v898, %v896
        %v935 = vunpack.c.l.b16 %v851
        %v936 = vunpack.c.h.b16 %v851
        %v937 = vunpack.c.l.b16 %v852
        %v938 = vunpack.c.h.b16 %v852
        %v939 = vunpack.c.l.b16 %v853
        %v940 = vunpack.c.h.b16 %v853
        %v941 = vunpack.c.l.b16 %v854
        %v942 = vunpack.c.h.b16 %v854
        %v943 = vunpack.c.l.b16 %v855
        %v944 = vunpack.c.h.b16 %v855
        %v945 = vunpack.c.l.b16 %v856
        %v946 = vunpack.c.h.b16 %v856
        %v947 = vunpack.c.l.b16 %v857
        %v948 = vunpack.c.h.b16 %v857
        %v949 = vunpack.c.l.b16 %v858
        %v950 = vunpack.c.h.b16 %v858
        %v951 = vunpack.c.l.b16 %v859
        %v952 = vunpack.c.h.b16 %v859
        %v953 = vunpack.c.l.b16 %v860
        %v954 = vunpack.c.h.b16 %v860
        %v955 = vunpack.c.l.b16 %v861
        %v956 = vunpack.c.h.b16 %v861
        %v957 = vunpack.c.l.b16 %v862
        %v958 = vunpack.c.h.b16 %v862
        %v959 = vunpack.c.l.b16 %v863
        %v960 = vunpack.c.h.b16 %v863
        %v961 = vunpack.c.l.b16 %v864
        %v962 = vunpack.c.h.b16 %v864
        %v963 = vunpack.c.l.b16 %v865
        %v964 = vunpack.c.h.b16 %v865
        %v965 = vunpack.c.l.b16 %v866
        %v966 = vunpack.c.h.b16 %v866
        %v967 = vunpack.c.l.b16 %v867
        %v968 = vunpack.c.h.b16 %v867
        %v969 = vunpack.c.l.b16 %v868
        %v970 = vunpack.c.h.b16 %v868
        %v971 = vunpack.c.l.b16 %v869
        %v972 = vunpack.c.h.b16 %v869
        %v973 = vunpack.c.l.b16 %v870
        %v974 = vunpack.c.h.b16 %v870
        %v975 = vunpack.c.l.b16 %v871
        %v976 = vunpack.c.h.b16 %v871
        %v977 = vunpack.c.l.b16 %v872
        %v978 = vunpack.c.h.b16 %v872
        %v979 = vunpack.c.l.b16 %v873
        %v980 = vunpack.c.h.b16 %v873
        %v981 = vunpack.c.l.b16 %v874
        %v982 = vunpack.c.h.b16 %v874
        %v983 = vpack.c.b16 %v937, %v935
        %v984 = vpack.c.b16 %v938, %v936
        %v985 = vpack.c.b16 %v941, %v939
        %v986 = vpack.c.b16 %v942, %v940
        %v987 = vpack.c.b16 %v945, %v943
        %v988 = vpack.c.b16 %v946, %v944
        %v989 = vpack.c.b16 %v949, %v947
        %v990 = vpack.c.b16 %v950, %v948
        %v991 = vpack.c.b16 %v953, %v951
        %v992 = vpack.c.b16 %v954, %v952
        %v993 = vpack.c.b16 %v957, %v955
        %v994 = vpack.c.b16 %v958, %v956
        %v995 = vpack.c.b16 %v961, %v959
        %v996 = vpack.c.b16 %v962, %v960
        %v997 = vpack.c.b16 %v965, %v963
        %v998 = vpack.c.b16 %v966, %v964
        %v999 = vpack.c.b16 %v969, %v967
        %v1000 = vpack.c.b16 %v970, %v968
        %v1001 = vpack.c.b16 %v973, %v971
        %v1002 = vpack.c.b16 %v974, %v972
        %v1003 = vpack.c.b16 %v977, %v975
        %v1004 = vpack.c.b16 %v978, %v976
        %v1005 = vpack.c.b16 %v981, %v979
        %v1006 = vpack.c.b16 %v982, %v980
        %v1032 = vsel %vm406, %v900, 0
        %v1035 = vsel %vm406, %v902, 0
        %v1038 = vsel %vm406, %v904, 0
        %v1041 = vsel %vm406, %v906, 0
        %1043 = vmatprep.subr.bf16.mxu0 %v984
        %1044 = vmatpush1.bf16.msra.mxu0 %v983
        %1045 = vmatprep.subr.bf16.mxu0 %v986
        %1046 = vmatpush1.bf16.msra.mxu0 %v985
        %1047 = vmatprep.subr.bf16.mxu0 %v988
        %1048 = vmatpush1.bf16.msra.mxu0 %v987
        %1049 = vmatprep.subr.bf16.mxu0 %v990
        %1050 = vmatpush1.bf16.msra.mxu0 %v989
        %1051 = vmatprep.subr.bf16.mxu0 %v992
        %1052 = vmatpush1.bf16.msra.mxu0 %v991
        %1053 = vmatprep.subr.bf16.mxu0 %v994
        %1054 = vmatpush1.bf16.msra.mxu0 %v993
        %1055 = vmatprep.subr.bf16.mxu0 %v996
        %1056 = vmatpush1.bf16.msra.mxu0 %v995
        %1057 = vmatprep.subr.bf16.mxu0 %v998
        %1058 = vmatpush1.bf16.msra.mxu0 %v997
        %1059 = vmatprep.subr.bf16.mxu0 %v1000
        %1060 = vmatpush1.bf16.msra.mxu0 %v999
        %1061 = vmatprep.subr.bf16.mxu0 %v1002
        %1062 = vmatpush1.bf16.msra.mxu0 %v1001
        %1063 = vmatprep.subr.bf16.mxu0 %v1004
        %1064 = vmatpush1.bf16.msra.mxu0 %v1003
        %1065 = vmatprep.subr.bf16.mxu0 %v1006
        %1066 = vmatpush1.bf16.msra.mxu0 %v1005
        %1067 = vmatprep.subr.bf16.mxu0 0
        %1068 = vmatpush1.bf16.msra.mxu0 0
        %1069 = vmatprep.subr.bf16.mxu0 0
        %1070 = vmatpush1.bf16.msra.mxu0 0
        %1071 = vmatprep.subr.bf16.mxu0 0
        %1072 = vmatpush1.bf16.msra.mxu0 0
        %1073 = vmatprep.subr.bf16.mxu0 0
        %1074 = vmatpush1.bf16.msra.mxu0 0
        %1075 = vmatprep.mubr.bf16.mxu0 %v1032
        %1076 = vmatmul.mubr.bf16.gmra.mrb[0].mxu0 %v899
        %v1077 = vpop.f32.mrb[0].mxu0
        %v1078 = vadd.f32 0.0, %v1077
        %v1079 = vpop.f32.mrb[0].mxu0
        %v1080 = vadd.f32 0.0, %v1079
        %v1081 = vpop.f32.mrb[0].mxu0
        %v1082 = vadd.f32 0.0, %v1081
        %v1083 = vpop.f32.mrb[0].mxu0
        %v1084 = vadd.f32 0.0, %v1083
        %1085 = vmatprep.mubr.bf16.mxu0 %v1035
        %1086 = vmatmul.mubr.bf16.gmra.mrb[0].mxu0 %v901
        %v1087 = vpop.f32.mrb[0].mxu0
        %v1088 = vadd.f32 0.0, %v1087
        %v1089 = vpop.f32.mrb[0].mxu0
        %v1090 = vadd.f32 0.0, %v1089
        %v1091 = vpop.f32.mrb[0].mxu0
        %v1092 = vadd.f32 0.0, %v1091
        %v1093 = vpop.f32.mrb[0].mxu0
        %v1094 = vadd.f32 0.0, %v1093
        %1095 = vmatprep.mubr.bf16.mxu0 %v1038
        %1096 = vmatmul.mubr.bf16.gmra.mrb[0].mxu0 %v903
        %v1097 = vpop.f32.mrb[0].mxu0
        %v1098 = vadd.f32 0.0, %v1097
        %v1099 = vpop.f32.mrb[0].mxu0
        %v1100 = vadd.f32 0.0, %v1099
        %v1101 = vpop.f32.mrb[0].mxu0
        %v1102 = vadd.f32 0.0, %v1101
        %v1103 = vpop.f32.mrb[0].mxu0
        %v1104 = vadd.f32 0.0, %v1103
        %1105 = vmatprep.mubr.bf16.mxu0 %v1041
        %1106 = vmatmul.mubr.bf16.gmra.mrb[0].mxu0 %v905
        %v1107 = vpop.f32.mrb[0].mxu0
        %v1108 = vadd.f32 0.0, %v1107
        %v1109 = vpop.f32.mrb[0].mxu0
        %v1110 = vadd.f32 0.0, %v1109
        %v1111 = vpop.f32.mrb[0].mxu0
        %v1112 = vadd.f32 0.0, %v1111
        %v1113 = vpop.f32.mrb[0].mxu0
        %v1114 = vadd.f32 0.0, %v1113
        %1115 = vdwg.mxu0
        %v1116 = vld [vmem:[#allocation2] sm:$0xff]
        %v1117 = vld [vmem:[#allocation2 + $0x8] sm:$0xff]
        %v1118 = vld [vmem:[#allocation2 + $0x10] sm:$0xff]
        %v1119 = vld [vmem:[#allocation2 + $0x18] sm:$0xff]
        %v1120 = vld [vmem:[#allocation2 + $0x20] sm:$0xff]
        %v1121 = vld [vmem:[#allocation2 + $0x28] sm:$0xff]
        %v1122 = vld [vmem:[#allocation2 + $0x30] sm:$0xff]
        %v1123 = vld [vmem:[#allocation2 + $0x38] sm:$0xff]
        %v1124 = vld [vmem:[#allocation2 + $0x40] sm:$0xff]
        %v1125 = vld [vmem:[#allocation2 + $0x48] sm:$0xff]
        %v1126 = vld [vmem:[#allocation2 + $0x50] sm:$0xff]
        %v1127 = vld [vmem:[#allocation2 + $0x58] sm:$0xff]
        %v1128 = vld [vmem:[#allocation2 + $0x60] sm:$0xff]
        %v1129 = vld [vmem:[#allocation2 + $0x68] sm:$0xff]
        %v1130 = vld [vmem:[#allocation2 + $0x70] sm:$0xff]
        %v1131 = vld [vmem:[#allocation2 + $0x78] sm:$0xff]
        %v1132 = vadd.f32 %v1116, %v1078
        %v1133 = vadd.f32 %v1117, %v1080
        %v1134 = vadd.f32 %v1118, %v1082
        %v1135 = vadd.f32 %v1119, %v1084
        %v1136 = vadd.f32 %v1120, %v1088
        %v1137 = vadd.f32 %v1121, %v1090
        %v1138 = vadd.f32 %v1122, %v1092
        %v1139 = vadd.f32 %v1123, %v1094
        %v1140 = vadd.f32 %v1124, %v1098
        %v1141 = vadd.f32 %v1125, %v1100
        %v1142 = vadd.f32 %v1126, %v1102
        %v1143 = vadd.f32 %v1127, %v1104
        %v1144 = vadd.f32 %v1128, %v1108
        %v1145 = vadd.f32 %v1129, %v1110
        %v1146 = vadd.f32 %v1130, %v1112
        %v1147 = vadd.f32 %v1131, %v1114
        %1148 = vst [vmem:[#allocation2] sm:$0xff] %v1132
        %1149 = vst [vmem:[#allocation2 + $0x8] sm:$0xff] %v1133
        %1150 = vst [vmem:[#allocation2 + $0x10] sm:$0xff] %v1134
        %1151 = vst [vmem:[#allocation2 + $0x18] sm:$0xff] %v1135
        %1152 = vst [vmem:[#allocation2 + $0x20] sm:$0xff] %v1136
        %1153 = vst [vmem:[#allocation2 + $0x28] sm:$0xff] %v1137
        %1154 = vst [vmem:[#allocation2 + $0x30] sm:$0xff] %v1138
        %1155 = vst [vmem:[#allocation2 + $0x38] sm:$0xff] %v1139
        %1156 = vst [vmem:[#allocation2 + $0x40] sm:$0xff] %v1140
        %1157 = vst [vmem:[#allocation2 + $0x48] sm:$0xff] %v1141
        %1158 = vst [vmem:[#allocation2 + $0x50] sm:$0xff] %v1142
        %1159 = vst [vmem:[#allocation2 + $0x58] sm:$0xff] %v1143
        %1160 = vst [vmem:[#allocation2 + $0x60] sm:$0xff] %v1144
        %1161 = vst [vmem:[#allocation2 + $0x68] sm:$0xff] %v1145
        %1162 = vst [vmem:[#allocation2 + $0x70] sm:$0xff] %v1146
        %1163 = vst [vmem:[#allocation2 + $0x78] sm:$0xff] %v1147
        %v1164 = vld [vmem:[#allocation2] sm:$0xff]
        %v1165 = vld [vmem:[#allocation2 + $0x8] sm:$0xff]
        %v1166 = vld [vmem:[#allocation2 + $0x10] sm:$0xff]
        %v1167 = vld [vmem:[#allocation2 + $0x18] sm:$0xff]
        %v1168 = vld [vmem:[#allocation2 + $0x20] sm:$0xff]
        %v1169 = vld [vmem:[#allocation2 + $0x28] sm:$0xff]
        %v1170 = vld [vmem:[#allocation2 + $0x30] sm:$0xff]
        %v1171 = vld [vmem:[#allocation2 + $0x38] sm:$0xff]
        %v1172 = vld [vmem:[#allocation2 + $0x40] sm:$0xff]
        %v1173 = vld [vmem:[#allocation2 + $0x48] sm:$0xff]
        %v1174 = vld [vmem:[#allocation2 + $0x50] sm:$0xff]
        %v1175 = vld [vmem:[#allocation2 + $0x58] sm:$0xff]
        %v1176 = vld [vmem:[#allocation2 + $0x60] sm:$0xff]
        %v1177 = vld [vmem:[#allocation2 + $0x68] sm:$0xff]
        %v1178 = vld [vmem:[#allocation2 + $0x70] sm:$0xff]
        %v1179 = vld [vmem:[#allocation2 + $0x78] sm:$0xff]
        %1180 = vst [vmem:[%s207] sm:$0xff] %v1164
        %1181 = vst [vmem:[%s207 + $0x8] sm:$0xff] %v1165
        %1182 = vst [vmem:[%s207 + $0x10] sm:$0xff] %v1166
        %1183 = vst [vmem:[%s207 + $0x18] sm:$0xff] %v1167
        %1184 = vst [vmem:[%s207 + $0x20] sm:$0xff] %v1168
        %1185 = vst [vmem:[%s207 + $0x28] sm:$0xff] %v1169
        %1186 = vst [vmem:[%s207 + $0x30] sm:$0xff] %v1170
        %1187 = vst [vmem:[%s207 + $0x38] sm:$0xff] %v1171
        %1188 = vst [vmem:[%s207 + $0x40] sm:$0xff] %v1172
        %1189 = vst [vmem:[%s207 + $0x48] sm:$0xff] %v1173
        %1190 = vst [vmem:[%s207 + $0x50] sm:$0xff] %v1174
        %1191 = vst [vmem:[%s207 + $0x58] sm:$0xff] %v1175
        %1192 = vst [vmem:[%s207 + $0x60] sm:$0xff] %v1176
        %1193 = vst [vmem:[%s207 + $0x68] sm:$0xff] %v1177
        %1194 = vst [vmem:[%s207 + $0x70] sm:$0xff] %v1178
        %1195 = vst [vmem:[%s207 + $0x78] sm:$0xff] %v1179
        %s1196 = sand.u32 %s103, 1
        %s1197 = scalar_lea.sflag [#allocation5], %s1196
        %s1198 = sand.u32 %s103, 1
        %s1199 = smul.addr %s1198, 128
        %s1200 = scalar_lea.vmem [#allocation8], %s1199
        // Predicated region
        $region37: #{tpu_custom_call.1} parent=27 // pred_check
          %p1201 = pneg %p113
        $region38: #{tpu_custom_call.1} parent=27 // pred_check_branch
          %1203 = sbr.rel (%p1201) target = $region40
        $region39: #{tpu_custom_call.1} parent=27 // pred_region
          %s1204 = smul.u32 8, %s27
          %s1205 = smul.u32 2, %s26
          %s1207 = ssub.s32 2048, 2048
          %1208 = vsyncadd %s1197, %s1207
          %s1209 = smul.addr %s1204, 2
          %s1210 = sadd.s32 %s1205, %s1209
          %s1211 = smul.addr %s25, 64
          %s1212 = sadd.s32 %s1210, %s1211
          %s1213 = smul.addr %s1212, 128
          %s1214 = scalar_lea.hbm %s2, %s1213
          %s1215 = sshll.u32 %s1200, 4
          %s1216 = int_to_ptr.vmem [resolvable:$true] %s1215
          %1221 = dma.vmem_to_hbm [thread:$0]  %s1216, 2048, %s1214, %s1197, 256, 256, 16
        $region40: #{tpu_custom_call.1} parent=27 // pred_fallthru
          _
      $region28: #{tpu_custom_call.1} parent=5 // pred_fallthru
        _
      %p1222 = scmp.le.s32.totalorder 2, %s15
      // Predicated region
      $region41: #{tpu_custom_call.1} parent=5 // pred_check
        %p1223 = pneg %p1222
      $region42: #{tpu_custom_call.1} parent=5 // pred_check_branch
        %1225 = sbr.rel (%p1223) target = $region44
      $region43: #{tpu_custom_call.1} parent=5 // pred_region
        %s1226 = ssub.s32 %s15, 2
        // Predicated region
        $region45: #{tpu_custom_call.1} parent=43 // pred_check
          %p1227 = pneg %p119
        $region46: #{tpu_custom_call.1} parent=43 // pred_check_branch
          %1229 = sbr.rel (%p1227) target = $region48
        $region47: #{tpu_custom_call.1} parent=43 // pred_region
          %s1230 = sand.u32 %s104, 1
          %s1231 = scalar_lea.sflag [#allocation5], %s1230
          %s1232 = sand.u32 %s104, 1
          %s1233 = smul.addr %s1232, 128
          %s1234 = scalar_lea.vmem [#allocation8], %s1233
          %1235 = dma.done %s1231, 2048
        $region48: #{tpu_custom_call.1} parent=43 // pred_fallthru
          _
      $region44: #{tpu_custom_call.1} parent=5 // pred_fallthru
        _
    $region6: #{tpu_custom_call.1} parent=1 // loop_footer
      %s19 = sadd.s32 1, %s15
    $region7: #{tpu_custom_call.1} parent=1 // loop_footer_branch
      %14 = sbr.rel target = $region3
    $region8: #{tpu_custom_call.1} parent=1 // loop_exit
      _
    %1236 = vsyncpa [#allocation4], 1
    %s1237 = scalar_lea.sflag [#allocation4], 1
    %1238 = vsyncpa %s1237, 1
    %1239 = vsyncpa [#allocation7], 1
    %1240 = vsyncpa [#allocation5], 1
    %s1241 = scalar_lea.sflag [#allocation5], 1
    %1242 = vsyncpa %s1241, 1

</llo_original>
